<compile_context>
chip_gen: v5e
topology: v5e:2x2
jax: 0.10.0
libtpu: 0.0.40
codegen_flags: <defaults>
</compile_context>

<pallas_src>
import functools

import jax
import jax.numpy as jnp
from jax.experimental import pallas as pl
from jax.experimental.pallas import tpu as pltpu


def _layernorm_kernel(x_ref, w_ref, b_ref, o_ref, *, eps, hidden):
    # x_ref: (tile_rows, hidden) in VMEM; w_ref/b_ref: (1, hidden) fp32.
    inv_n = jnp.float32(1.0 / hidden)
    x = x_ref[...].astype(jnp.float32)

    # Two-pass moments (numerically robust vs. E[x^2]-E[x]^2).
    mean = jnp.sum(x, axis=-1, keepdims=True) * inv_n
    xc = x - mean                                        # centered; reused for output
    var = jnp.sum(xc * xc, axis=-1, keepdims=True) * inv_n
    inv = jax.lax.rsqrt(var + eps)                       # eps inside the sqrt (EUP)

    # Single fused write: scale/shift and store lane-dense in one expression.
    o_ref[...] = (w_ref[...] * (xc * inv) + b_ref[...]).astype(o_ref.dtype)


def _vmem_capacity_bytes():
    try:
        return int(pltpu.get_tpu_info().vmem_capacity_bytes)
    except Exception:
        # Safe on every generation: v7x per-TC VMEM is 64 MiB (v5e/v6e have 128).
        return 64 * 1024 * 1024


def _row_alignment(itemsize):
    # Sublane packing: f32 -> 8, bf16/f16 -> 16, int8/fp8 -> 32.
    if itemsize >= 4:
        return 8
    if itemsize == 2:
        return 16
    return 32


def _choose_tile_rows(rows, hidden, itemsize):
    row_align = _row_alignment(itemsize)
    if rows <= 2 * row_align:
        # Too few rows to split into aligned tiles: one full-extent block.
        return rows

    # ~2 MiB native-dtype input blocks: measured Pallas data shows 1-4 MiB blocks
    # already reach ~85% of the HBM roofline; bigger blocks buy ~1% but cost VMEM
    # headroom and pipeline fill/drain (and a bigger wasted cdiv() tail).
    target_block_bytes = 2 * 1024 * 1024
    tile = target_block_bytes // max(hidden * itemsize, 1)

    # Guarantee >= ~4 grid steps when rows allow: keeps the DMA pipeline busy and
    # lets dimension_semantics=("parallel",) shard steps across both v7x cores.
    tile = min(tile, pl.cdiv(rows, 4), 1024)
    tile = max(row_align, (tile // row_align) * row_align)
    return tile


def _vmem_limit_bytes(tile_rows, hidden, itemsize):
    block = tile_rows * hidden
    # 2x double-buffered input + 2x double-buffered output (native dtype)
    # + ~2 full-tile fp32 temps (x, xc) + fp32 w/b.
    needed = 4 * block * itemsize + 2 * block * 4 + 2 * hidden * 4
    limit = int(needed * 1.5) + (1 << 20)  # headroom + slack
    vmem = _vmem_capacity_bytes()
    cap = max(32 * 1024 * 1024, vmem * 3 // 4)  # never relies on a 128 MiB guess
    return int(min(max(32 * 1024 * 1024, limit), cap))


def layer_norm(x, weight, bias, eps=1e-12, tile_rows=None):
    """x: (..., hidden). weight, bias: (hidden,). Returns same shape/dtype as x.

    Note: for peak throughput hidden should be a multiple of 128 (lane-dense
    stores); smaller hiddens (e.g. 32) are correct but under-use lanes.
    """
    orig_shape = x.shape
    hidden = orig_shape[-1]
    rows = 1
    for d in orig_shape[:-1]:
        rows *= d
    x2 = x.reshape(rows, hidden)

    itemsize = jnp.dtype(x.dtype).itemsize
    if tile_rows is None:
        tile_rows = _choose_tile_rows(rows, hidden, itemsize)
    tile_rows = min(tile_rows, rows)
    # TODO(synk): for extremely large hidden where even row_align rows exceed the
    # VMEM budget, add a second "arbitrary" grid axis over hidden with scratch
    # accumulation of the moments; the full-hidden-in-one-block design overflows
    # at half the hidden size on v7x (64 MiB VMEM) vs v5e/v6e.

    # Cast parameters once here so the kernel does no per-step w/b conversion.
    w2 = weight.astype(jnp.float32).reshape(1, hidden)
    b2 = bias.astype(jnp.float32).reshape(1, hidden)

    grid = (pl.cdiv(rows, tile_rows),)  # partial last block handled via masked stores
    kernel = functools.partial(_layernorm_kernel, eps=float(eps), hidden=hidden)

    out = pl.pallas_call(
        kernel,
        out_shape=jax.ShapeDtypeStruct((rows, hidden), x.dtype),
        grid_spec=pltpu.PrefetchScalarGridSpec(
            num_scalar_prefetch=0,
            grid=grid,
            in_specs=[
                pl.BlockSpec((tile_rows, hidden), lambda i: (i, 0)),
                pl.BlockSpec((1, hidden), lambda i: (0, 0)),
                pl.BlockSpec((1, hidden), lambda i: (0, 0)),
            ],
            out_specs=pl.BlockSpec((tile_rows, hidden), lambda i: (i, 0)),
        ),
        compiler_params=pltpu.CompilerParams(
            dimension_semantics=("parallel",),
            vmem_limit_bytes=_vmem_limit_bytes(tile_rows, hidden, itemsize),
        ),
    )(x2, w2, b2)

    return out.reshape(orig_shape)


def _reference(x, weight, bias, eps):
    u = jnp.mean(x, axis=-1, keepdims=True)
    s = jnp.mean((x - u) ** 2, axis=-1, keepdims=True)
    return weight * ((x - u) / jnp.sqrt(s + eps)) + bias


if __name__ == "__main__":
    key = jax.random.PRNGKey(0)
    batch, seq, hidden = 2, 8, 32
    x = jax.random.normal(key, (batch, seq, hidden), dtype=jnp.float32)

    # nn.Parameter(torch.ones(hidden)) / nn.Parameter(torch.zeros(hidden))
    weight = jnp.ones((hidden,), jnp.float32)
    bias = jnp.zeros((hidden,), jnp.float32)
    eps = 1e-12  # matches the module's default variance_epsilon

    y = layer_norm(x, weight, bias, eps=eps)
    jax.block_until_ready(y)
    ref = _reference(x, weight, bias, eps)
    assert jnp.allclose(y, ref, atol=1e-5, rtol=1e-5), float(jnp.max(jnp.abs(y - ref)))

    # Exercise the un-padded cdiv path (rows=15 not divisible by tile_rows=8).
    x_odd = jax.random.normal(jax.random.PRNGKey(1), (15, hidden), dtype=jnp.float32)
    y_odd = layer_norm(x_odd, weight, bias, eps=eps, tile_rows=8)
    jax.block_until_ready(y_odd)
    ref_odd = _reference(x_odd, weight, bias, eps)
    assert jnp.allclose(y_odd, ref_odd, atol=1e-5, rtol=1e-5)

    # Exercise two-pass-variance robustness: large mean relative to std.
    x_shift = x + 1000.0
    y_shift = layer_norm(x_shift, weight, bias, eps=eps)
    jax.block_until_ready(y_shift)
    ref_shift = _reference(x_shift, weight, bias, eps)
    assert jnp.allclose(y_shift, ref_shift, atol=1e-3, rtol=1e-3)

    print("KERNEL_OK")
</pallas_src>

<mosaic_0001>
module attributes {stable_mosaic.version = 11 : i64} {
  func.func @_layernorm_kernel(%arg0: i32, %arg1: memref<16x32xf32, #tpu.memory_space<vmem>>, %arg2: memref<1x32xf32, #tpu.memory_space<vmem>>, %arg3: memref<1x32xf32, #tpu.memory_space<vmem>>, %arg4: memref<16x32xf32, #tpu.memory_space<vmem>>) attributes {dimension_semantics = [#tpu.dimension_semantics<parallel>], iteration_bounds = array<i64: 1>, scalar_prefetch = 0 : i64, scratch_operands = 0 : i64, tpu.core_type = #tpu.core_type<tc>, window_params = [{transform_indices = @transform_0, window_bounds = array<i64: 16, 32>}, {pipeline_mode = #tpu.pipeline_mode<synchronous>, transform_indices = @transform_1, window_bounds = array<i64: 1, 32>}, {pipeline_mode = #tpu.pipeline_mode<synchronous>, transform_indices = @transform_2, window_bounds = array<i64: 1, 32>}, {transform_indices = @transform_3, window_bounds = array<i64: 16, 32>}]} {
    %c0 = arith.constant 0 : index
    %c0_0 = arith.constant 0 : index
    %0 = vector.load %arg1[%c0, %c0_0] : memref<16x32xf32, #tpu.memory_space<vmem>>, vector<16x32xf32>
    %cst = arith.constant dense<0.000000e+00> : vector<16xf32>
    %1 = vector.multi_reduction <add>, %0, %cst [1] : vector<16x32xf32> to vector<16xf32>
    %2 = vector.shape_cast %1 : vector<16xf32> to vector<16x1xf32>
    %cst_1 = arith.constant 3.125000e-02 : f32
    %3 = vector.broadcast %cst_1 : f32 to vector<16x1xf32>
    %4 = arith.mulf %2, %3 : vector<16x1xf32>
    %5 = vector.broadcast %4 : vector<16x1xf32> to vector<16x32xf32>
    %6 = arith.subf %0, %5 : vector<16x32xf32>
    %7 = arith.mulf %6, %6 : vector<16x32xf32>
    %cst_2 = arith.constant dense<0.000000e+00> : vector<16xf32>
    %8 = vector.multi_reduction <add>, %7, %cst_2 [1] : vector<16x32xf32> to vector<16xf32>
    %9 = vector.shape_cast %8 : vector<16xf32> to vector<16x1xf32>
    %cst_3 = arith.constant 3.125000e-02 : f32
    %10 = vector.broadcast %cst_3 : f32 to vector<16x1xf32>
    %11 = arith.mulf %9, %10 : vector<16x1xf32>
    %cst_4 = arith.constant 9.99999996E-13 : f32
    %12 = vector.broadcast %cst_4 : f32 to vector<16x1xf32>
    %13 = arith.addf %11, %12 : vector<16x1xf32>
    %14 = math.rsqrt %13 : vector<16x1xf32>
    %c0_5 = arith.constant 0 : index
    %c0_6 = arith.constant 0 : index
    %15 = vector.load %arg2[%c0_5, %c0_6] : memref<1x32xf32, #tpu.memory_space<vmem>>, vector<1x32xf32>
    %16 = vector.broadcast %14 : vector<16x1xf32> to vector<16x32xf32>
    %17 = arith.mulf %6, %16 : vector<16x32xf32>
    %18 = vector.broadcast %15 : vector<1x32xf32> to vector<16x32xf32>
    %19 = arith.mulf %18, %17 : vector<16x32xf32>
    %c0_7 = arith.constant 0 : index
    %c0_8 = arith.constant 0 : index
    %20 = vector.load %arg3[%c0_7, %c0_8] : memref<1x32xf32, #tpu.memory_space<vmem>>, vector<1x32xf32>
    %21 = vector.broadcast %20 : vector<1x32xf32> to vector<16x32xf32>
    %22 = arith.addf %19, %21 : vector<16x32xf32>
    %c0_9 = arith.constant 0 : index
    %c0_10 = arith.constant 0 : index
    %23 = vector.load %arg4[%c0_9, %c0_10] : memref<16x32xf32, #tpu.memory_space<vmem>>, vector<16x32xf32>
    tpu.vector_store %arg4[%c0_9, %c0_10], %22 {strides = array<i32>} : memref<16x32xf32, #tpu.memory_space<vmem>>, vector<16x32xf32>,
    return
  }
  func.func @transform_0(%arg0: i32) -> (i32, i32) {
    %c0_i32 = arith.constant 0 : i32
    %c0_i32_0 = arith.constant 0 : i32
    return %arg0, %c0_i32 : i32, i32
  }
  func.func @transform_1(%arg0: i32) -> (i32, i32) {
    %c0_i32 = arith.constant 0 : i32
    %c0_i32_0 = arith.constant 0 : i32
    %c0_i32_1 = arith.constant 0 : i32
    return %c0_i32, %c0_i32_0 : i32, i32
  }
  func.func @transform_2(%arg0: i32) -> (i32, i32) {
    %c0_i32 = arith.constant 0 : i32
    %c0_i32_0 = arith.constant 0 : i32
    %c0_i32_1 = arith.constant 0 : i32
    return %c0_i32, %c0_i32_0 : i32, i32
  }
  func.func @transform_3(%arg0: i32) -> (i32, i32) {
    %c0_i32 = arith.constant 0 : i32
    %c0_i32_0 = arith.constant 0 : i32
    return %arg0, %c0_i32 : i32, i32
  }
}

</mosaic_0001>

<llo_original>
// kernel: tpu_custom_call.1
$region0: #{tpu_custom_call.1}
  #allocation0 [shape = 'u32[]', space=smem, size = 0x4, offset = 0x4, fixed_abs, tag = 'smem constant byte address 0x4 - core index']
  #allocation1 [shape = 'u32[72,128]{1,0:T(1,128)}', space=vmem, size = 0x9000, scoped, tag = 'internal scratch']
  %s0 = inlined_call_operand.hbm [shape: f32[16,32], index: 0, kind: input, shape index: {}]
  %s1 = inlined_call_operand.hbm [shape: f32[1,32], index: 1, kind: input, shape index: {}]
  %s2 = inlined_call_operand.vmem [shape: f32[1,32], index: 2, kind: input, shape index: {}]
  %s3 = inlined_call_operand.hbm [shape: f32[16,32], index: 3, kind: output, shape index: {}]
  %s4 = sld [smem:[#allocation0]]
  $region30: #{tpu_custom_call.1} parent=0
    _
  %s6 = ssub.s32 1, %s4
  %s7 = scalar_select 0, %s6, %s4
  $region1: #{tpu_custom_call.1} parent=0
    #allocation2 [shape = 'u8[8192]{0}', space=vmem, size = 0x2000, scoped, tag = 'input window, operand 0, single buffered']
    #allocation3 [shape = 's32[1]{0}', space=sflag, size = 0x4, scoped, tag = 'scoped memory for tpu_custom_call.1']
    #allocation4 [shape = 's32[1]{0}', space=sflag, size = 0x4, scoped, tag = 'scoped memory for tpu_custom_call.1']
    #allocation5 [shape = 'u8[512]{0}', space=vmem, size = 0x400, scoped, tag = 'input window, operand 1, single buffered']
    #allocation6 [shape = 's32[1]{0}', space=sflag, size = 0x4, scoped, tag = 'scoped memory for tpu_custom_call.1']
    #allocation7 [shape = 'u8[8192]{0}', space=vmem, size = 0x2000, scoped, tag = 'output window, operand 0, single buffered']
    %8 = vsyncpa [#allocation3], 0
    %9 = vsyncpa [#allocation6], 0
    %10 = vsyncpa [#allocation4], 0
    // Predicated region
    $region2: #{tpu_custom_call.1} parent=1 // pred_check
      _
    $region3: #{tpu_custom_call.1} parent=1 // pred_check_branch
      %12 = sbr.rel (0) target = $region5
    $region4: #{tpu_custom_call.1} parent=1 // pred_region
      %14 = vsyncadd [#allocation3], 0
      %s15 = sshll.u32 %s0, 4
      %s16 = int_to_ptr.hbm [resolvable:$true] %s15
      %s17 = sshll.u32 [#allocation2], 4
      %s18 = int_to_ptr.vmem [resolvable:$true] %s17
      %23 = dma.hbm_to_vmem [thread:$0]  %s16, 256, %s18, [#allocation3], 128, 128, 8
    $region5: #{tpu_custom_call.1} parent=1 // pred_fallthru
      _
    // Predicated region
    $region6: #{tpu_custom_call.1} parent=1 // pred_check
      _
    $region7: #{tpu_custom_call.1} parent=1 // pred_check_branch
      %25 = sbr.rel (0) target = $region9
    $region8: #{tpu_custom_call.1} parent=1 // pred_region
      %27 = vsyncadd [#allocation6], 0
      %s29 = sshll.u32 %s1, 4
      %s30 = int_to_ptr.hbm [resolvable:$true] %s29
      %s31 = sshll.u32 [#allocation5], 4
      %s32 = int_to_ptr.vmem [resolvable:$true] %s31
      %34 = dma.hbm_to_vmem [thread:$0]  %s30, 16, %s32, [#allocation6]
    $region9: #{tpu_custom_call.1} parent=1 // pred_fallthru
      _
    // Predicated region
    $region10: #{tpu_custom_call.1} parent=1 // pred_check
      _
    $region11: #{tpu_custom_call.1} parent=1 // pred_check_branch
      %36 = sbr.rel (0) target = $region13
    $region12: #{tpu_custom_call.1} parent=1 // pred_region
      _
    $region13: #{tpu_custom_call.1} parent=1 // pred_fallthru
      _
    // Predicated region
    $region14: #{tpu_custom_call.1} parent=1 // pred_check
      _
    $region15: #{tpu_custom_call.1} parent=1 // pred_check_branch
      %38 = sbr.rel (0) target = $region17
    $region16: #{tpu_custom_call.1} parent=1 // pred_region
      %40 = dma.done [#allocation3], 256
    $region17: #{tpu_custom_call.1} parent=1 // pred_fallthru
      _
    // Predicated region
    $region18: #{tpu_custom_call.1} parent=1 // pred_check
      _
    $region19: #{tpu_custom_call.1} parent=1 // pred_check_branch
      %42 = sbr.rel (0) target = $region21
    $region20: #{tpu_custom_call.1} parent=1 // pred_region
      %44 = dma.done [#allocation6], 16
    $region21: #{tpu_custom_call.1} parent=1 // pred_fallthru
      _
    %v45 = vld [vmem:[#allocation2] sm:$0xff]
    %v46 = vld [vmem:[#allocation2 + $0x8] sm:$0xff]
    %vm47 = vcmask 261120
    %v48 = vsel %vm47, %v45, 0.0
    %49 = vadd.xlane.f32.xlu0 %v48
    %v50 = vpop.xlane.xlu0 %49
    %v51 = vsel %vm47, %v46, 0.0
    %52 = vadd.xlane.f32.xlu0 %v51
    %v53 = vpop.xlane.xlu0 %52
    %v54 = vmul.f32 %v50, 0.03125
    %v55 = vmul.f32 %v53, 0.03125
    %v56 = vsub.f32 %v45, %v54
    %v57 = vsub.f32 %v46, %v55
    %v58 = vmul.f32 %v56, %v56
    %v59 = vmul.f32 %v57, %v57
    %v60 = vsel %vm47, %v58, 0.0
    %61 = vadd.xlane.f32.xlu0 %v60
    %v62 = vpop.xlane.xlu0 %61
    %v63 = vsel %vm47, %v59, 0.0
    %64 = vadd.xlane.f32.xlu0 %v63
    %v65 = vpop.xlane.xlu0 %64
    %v66 = vmul.f32 %v62, 0.03125
    %v67 = vmul.f32 %v65, 0.03125
    %v68 = vadd.f32 %v66, 1e-12
    %v69 = vadd.f32 %v67, 1e-12
    %v70 = vrsqrt.pop %v68
    %v71 = vmul.f32 %v70, %v68
    %v72 = vmul.f32 %v71, %v70
    %v73 = vmul.f32 0.5, %v72
    %v74 = vsub.f32 1.5, %v73
    %v75 = vmul.f32 %v70, %v74
    %vm76 = vweird.f32 %v68
    %vm77 = vweird.f32 %v70
    %vm78 = vmor %vm76, %vm77
    %v79 = vsel %vm78, %v70, %v75
    %v80 = vrsqrt.pop %v69
    %v81 = vmul.f32 %v80, %v69
    %v82 = vmul.f32 %v81, %v80
    %v83 = vmul.f32 0.5, %v82
    %v84 = vsub.f32 1.5, %v83
    %v85 = vmul.f32 %v80, %v84
    %vm86 = vweird.f32 %v69
    %vm87 = vweird.f32 %v80
    %vm88 = vmor %vm86, %vm87
    %v89 = vsel %vm88, %v80, %v85
    %v90 = vld [vmem:[#allocation5] sm:$0x1]
    %v91 = vmul.f32 %v56, %v79
    %v92 = vmul.f32 %v57, %v89
    %v94 = vperm.slane %v90, 0
    %v96 = vmul.f32 %v94, %v91
    %v97 = vmul.f32 %v94, %v92
    %v98 = vld [vmem:[%s2] sm:$0x1]
    %v100 = vperm.slane %v98, 0
    %v102 = vadd.f32 %v96, %v100
    %v103 = vadd.f32 %v97, %v100
    %104 = vst.msk [vmem:[#allocation7] sm:$0xff] %vm47, %v102
    %105 = vst.msk [vmem:[#allocation7 + $0x8] sm:$0xff] %vm47, %v103
    // Predicated region
    $region22: #{tpu_custom_call.1} parent=1 // pred_check
      _
    $region23: #{tpu_custom_call.1} parent=1 // pred_check_branch
      %107 = sbr.rel (0) target = $region25
    $region24: #{tpu_custom_call.1} parent=1 // pred_region
      %109 = vsyncadd [#allocation4], 0
      %s110 = sshll.u32 [#allocation7], 4
      %s111 = int_to_ptr.vmem [resolvable:$true] %s110
      %s112 = sshll.u32 %s3, 4
      %s113 = int_to_ptr.hbm [resolvable:$true] %s112
      %118 = dma.vmem_to_hbm [thread:$0]  %s111, 256, %s113, [#allocation4], 128, 128, 8
    $region25: #{tpu_custom_call.1} parent=1 // pred_fallthru
      _
    // Predicated region
    $region26: #{tpu_custom_call.1} parent=1 // pred_check
      _
    $region27: #{tpu_custom_call.1} parent=1 // pred_check_branch
      %120 = sbr.rel (0) target = $region29
    $region28: #{tpu_custom_call.1} parent=1 // pred_region
      %122 = dma.done [#allocation4], 256
    $region29: #{tpu_custom_call.1} parent=1 // pred_fallthru
      _
    %123 = vsyncpa [#allocation3], 1
    %124 = vsyncpa [#allocation6], 1
    %125 = vsyncpa [#allocation4], 1

</llo_original>
